<compile_context>
chip_gen: v5e
topology: v5e:2x2
jax: 0.10.0
libtpu: 0.0.40
codegen_flags: <defaults>
</compile_context>

<pallas_src>
import jax
import jax.numpy as jnp
from jax.experimental import pallas as pl
from jax.experimental.pallas import tpu as pltpu

_LANE = 128
_SUBLANE = 8
_TILED_B_THRESHOLD = 1024   # above this many (padded) rows, use the B-tiled path
_TB = 512                   # batch tile for the streaming path


def _round_up(x, m):
    return (x + m - 1) // m * m


def _linear_kernel(x_ref, w_ref, b_ref, o_ref):
    # y = x @ W + b : MXU matmul with f32 accumulation, f32 epilogue on the VPU.
    acc = jnp.dot(x_ref[...], w_ref[...], preferred_element_type=jnp.float32)
    o_ref[...] = (acc + b_ref[...]).astype(o_ref.dtype)


def init_params(key, ear_anthro_dim, ear_emb_dim):
    """nn.Linear-style init U(-1/sqrt(in), 1/sqrt(in)), stored pre-transposed
    AND pre-padded to TPU-friendly shapes:
        weight_t: (round_up(d_in, 8), round_up(d_out, 128))
        bias:     (round_up(d_out, 128),)
    Padding rows/cols are zero, so the padded matmul is exact on the logical
    (d_in, d_out) slice."""
    kw, kb = jax.random.split(key)
    bound = 1.0 / jnp.sqrt(jnp.float32(ear_anthro_dim))
    w = jax.random.uniform(kw, (ear_anthro_dim, ear_emb_dim), jnp.float32, -bound, bound)
    b = jax.random.uniform(kb, (ear_emb_dim,), jnp.float32, -bound, bound)

    d_in_pad = _round_up(ear_anthro_dim, _SUBLANE)
    d_out_pad = _round_up(ear_emb_dim, _LANE)
    w_pad = jnp.zeros((d_in_pad, d_out_pad), jnp.float32)
    w_pad = w_pad.at[:ear_anthro_dim, :ear_emb_dim].set(w)
    b_pad = jnp.zeros((d_out_pad,), jnp.float32).at[:ear_emb_dim].set(b)
    return w_pad, b_pad


def ear_measure_encoder_forward(ear_anthro, weight_t, bias, ear_emb_dim):
    """Pallas equivalent of EarMeasureEncoder.forward.

    ear_anthro: (B, d_in) float32
    weight_t:   (d_in_pad, d_out_pad) float32, zero-padded, pre-transposed
    bias:       (d_out_pad,) float32, zero-padded
    returns:    (B, ear_emb_dim) float32
    """
    B, d_in = ear_anthro.shape
    d_in_pad, d_out_pad = weight_t.shape
    assert d_in <= d_in_pad and ear_emb_dim <= d_out_pad
    assert d_in_pad % _SUBLANE == 0 and d_out_pad % _LANE == 0

    # Align batch to a sublane multiple; zero-pad contraction dim to match the
    # padded weight. (Pad/slice are cheap XLA ops fused around the custom call.)
    b_rows = max(_round_up(B, _SUBLANE), _SUBLANE)
    x = jnp.pad(ear_anthro.astype(jnp.float32),
                ((0, b_rows - B), (0, d_in_pad - d_in)))
    bias2d = bias.reshape(1, d_out_pad)

    flops = 2 * b_rows * d_in_pad * d_out_pad
    bytes_accessed = 4 * (b_rows * d_in_pad + d_in_pad * d_out_pad
                          + d_out_pad + b_rows * d_out_pad)
    cost = pl.CostEstimate(flops=flops, transcendentals=0,
                           bytes_accessed=bytes_accessed)

    if b_rows <= _TILED_B_THRESHOLD:
        # Small-batch path: no grid, no pipeline machinery.
        out_padded = pl.pallas_call(
            _linear_kernel,
            out_shape=jax.ShapeDtypeStruct((b_rows, d_out_pad), jnp.float32),
            in_specs=[
                pl.BlockSpec(memory_space=pltpu.MemorySpace.VMEM),
                pl.BlockSpec(memory_space=pltpu.MemorySpace.VMEM),
                pl.BlockSpec(memory_space=pltpu.MemorySpace.VMEM),
            ],
            out_specs=pl.BlockSpec(memory_space=pltpu.MemorySpace.VMEM),
            cost_estimate=cost,
        )(x, weight_t, bias2d)
    else:
        # Streaming path for large B: tile the batch ("parallel" -> megacore
        # split on v7x), keep weight/bias resident in VMEM across the grid.
        b_grid = _round_up(b_rows, _TB)
        if b_grid != b_rows:
            x = jnp.pad(x, ((0, b_grid - b_rows), (0, 0)))
        out_padded = pl.pallas_call(
            _linear_kernel,
            out_shape=jax.ShapeDtypeStruct((b_grid, d_out_pad), jnp.float32),
            grid_spec=pl.GridSpec(
                grid=(b_grid // _TB,),
                in_specs=[
                    pl.BlockSpec((_TB, d_in_pad), lambda i: (i, 0)),
                    pl.BlockSpec((d_in_pad, d_out_pad), lambda i: (0, 0)),
                    pl.BlockSpec((1, d_out_pad), lambda i: (0, 0)),
                ],
                out_specs=pl.BlockSpec((_TB, d_out_pad), lambda i: (i, 0)),
            ),
            compiler_params=pltpu.CompilerParams(
                dimension_semantics=("parallel",)),
            cost_estimate=cost,
        )(x, weight_t, bias2d)

    return out_padded[:B, :ear_emb_dim]


if __name__ == "__main__":
    key = jax.random.PRNGKey(0)
    k_in, k_params, k_big = jax.random.split(key, 3)

    batch = 2
    ear_anthro_dim = 12   # e.g. 12 ear anthropometric measurements
    ear_emb_dim = 32      # embedding dimension

    weight_t, bias = init_params(k_params, ear_anthro_dim, ear_emb_dim)
    w_logical = weight_t[:ear_anthro_dim, :ear_emb_dim]
    b_logical = bias[:ear_emb_dim]

    fwd = jax.jit(ear_measure_encoder_forward, static_argnums=(3,))

    # --- small-batch path (no grid) ---
    ear_anthro = jax.random.normal(k_in, (batch, ear_anthro_dim), jnp.float32)
    out = jax.block_until_ready(fwd(ear_anthro, weight_t, bias, ear_emb_dim))
    ref = ear_anthro @ w_logical + b_logical
    assert out.shape == (batch, ear_emb_dim)
    assert jnp.allclose(out, ref, atol=1e-5, rtol=1e-5)

    # --- large-batch streaming path (B-tiled grid, resident weight) ---
    big_batch = 2048
    ear_anthro_big = jax.random.normal(
        k_big, (big_batch, ear_anthro_dim), jnp.float32)
    out_big = jax.block_until_ready(
        fwd(ear_anthro_big, weight_t, bias, ear_emb_dim))
    ref_big = ear_anthro_big @ w_logical + b_logical
    assert out_big.shape == (big_batch, ear_emb_dim)
    assert jnp.allclose(out_big, ref_big, atol=1e-4, rtol=1e-4)

    print("KERNEL_OK")
</pallas_src>

<mosaic_0001>
module attributes {stable_mosaic.version = 11 : i64} {
  func.func @_linear_kernel(%arg0: memref<8x16xf32, #tpu.memory_space<vmem>>, %arg1: memref<16x128xf32, #tpu.memory_space<vmem>>, %arg2: memref<1x128xf32, #tpu.memory_space<vmem>>, %arg3: memref<8x128xf32, #tpu.memory_space<vmem>>) attributes {dimension_semantics = [], scalar_prefetch = 0 : i64, scratch_operands = 0 : i64, tpu.core_type = #tpu.core_type<tc>} {
    %c0 = arith.constant 0 : index
    %c0_0 = arith.constant 0 : index
    %0 = vector.load %arg0[%c0, %c0_0] : memref<8x16xf32, #tpu.memory_space<vmem>>, vector<8x16xf32>
    %c0_1 = arith.constant 0 : index
    %c0_2 = arith.constant 0 : index
    %1 = vector.load %arg1[%c0_1, %c0_2] : memref<16x128xf32, #tpu.memory_space<vmem>>, vector<16x128xf32>
    %cst = arith.constant dense<0.000000e+00> : vector<8x128xf32>
    %2 = tpu.matmul %0, %1, %cst {dimension_numbers = #tpu.dot_dimension_numbers<[1], [0], [0], [1], [0, 0, 1, 1], [], []>} : vector<8x16xf32>, vector<16x128xf32>, vector<8x128xf32> -> vector<8x128xf32>
    %c0_3 = arith.constant 0 : index
    %c0_4 = arith.constant 0 : index
    %3 = vector.load %arg2[%c0_3, %c0_4] : memref<1x128xf32, #tpu.memory_space<vmem>>, vector<1x128xf32>
    %4 = vector.broadcast %3 : vector<1x128xf32> to vector<8x128xf32>
    %5 = arith.addf %2, %4 : vector<8x128xf32>
    %c0_5 = arith.constant 0 : index
    %c0_6 = arith.constant 0 : index
    %6 = vector.load %arg3[%c0_5, %c0_6] : memref<8x128xf32, #tpu.memory_space<vmem>>, vector<8x128xf32>
    tpu.vector_store %arg3[%c0_5, %c0_6], %5 {strides = array<i32>} : memref<8x128xf32, #tpu.memory_space<vmem>>, vector<8x128xf32>,
    return
  }
}

</mosaic_0001>

<llo_original>
// kernel: ear_measure_encoder_forward.1
$region0: #{ear_measure_encoder_forward.1}
  #allocation0 [shape = 'u32[]', space=smem, size = 0x4, offset = 0x4, fixed_abs, tag = 'smem constant byte address 0x4 - core index']
  #allocation1 [shape = 'u32[72,128]{1,0:T(1,128)}', space=vmem, size = 0x9000, scoped, tag = 'internal scratch']
  %s0 = inlined_call_operand.vmem [shape: f32[8,16], index: 0, kind: input, shape index: {}]
  %s1 = inlined_call_operand.hbm [shape: f32[16,128], index: 1, kind: input, shape index: {}]
  %s2 = inlined_call_operand.vmem [shape: f32[1,128], index: 2, kind: input, shape index: {}]
  %s3 = inlined_call_operand.vmem [shape: f32[8,128], index: 3, kind: output, shape index: {}]
  %s4 = sld [smem:[#allocation0]]
  $region26: #{ear_measure_encoder_forward.1} parent=0
    _
  %s6 = ssub.s32 1, %s4
  %s7 = scalar_select 0, %s6, %s4
  $region1: #{ear_measure_encoder_forward.1} parent=0
    #allocation2 [shape = 'u8[8192]{0}', space=vmem, size = 0x2000, scoped, tag = 'input window, operand 1, single buffered']
    #allocation3 [shape = 's32[1]{0}', space=sflag, size = 0x4, scoped, tag = 'scoped memory for ear_measure_encoder_forward.1']
    %8 = vsyncpa [#allocation3], 0
    // Predicated region
    $region2: #{ear_measure_encoder_forward.1} parent=1 // pred_check
      _
    $region3: #{ear_measure_encoder_forward.1} parent=1 // pred_check_branch
      %10 = sbr.rel (0) target = $region5
    $region4: #{ear_measure_encoder_forward.1} parent=1 // pred_region
      _
    $region5: #{ear_measure_encoder_forward.1} parent=1 // pred_fallthru
      _
    // Predicated region
    $region6: #{ear_measure_encoder_forward.1} parent=1 // pred_check
      _
    $region7: #{ear_measure_encoder_forward.1} parent=1 // pred_check_branch
      %12 = sbr.rel (0) target = $region9
    $region8: #{ear_measure_encoder_forward.1} parent=1 // pred_region
      %14 = vsyncadd [#allocation3], 0
      %s15 = sshll.u32 %s1, 4
      %s16 = int_to_ptr.hbm [resolvable:$true] %s15
      %s17 = sshll.u32 [#allocation2], 4
      %s18 = int_to_ptr.vmem [resolvable:$true] %s17
      %23 = dma.hbm_to_vmem [thread:$0]  %s16, 256, %s18, [#allocation3], 128, 128, 8
    $region9: #{ear_measure_encoder_forward.1} parent=1 // pred_fallthru
      _
    // Predicated region
    $region10: #{ear_measure_encoder_forward.1} parent=1 // pred_check
      _
    $region11: #{ear_measure_encoder_forward.1} parent=1 // pred_check_branch
      %25 = sbr.rel (0) target = $region13
    $region12: #{ear_measure_encoder_forward.1} parent=1 // pred_region
      _
    $region13: #{ear_measure_encoder_forward.1} parent=1 // pred_fallthru
      _
    // Predicated region
    $region14: #{ear_measure_encoder_forward.1} parent=1 // pred_check
      _
    $region15: #{ear_measure_encoder_forward.1} parent=1 // pred_check_branch
      %27 = sbr.rel (0) target = $region17
    $region16: #{ear_measure_encoder_forward.1} parent=1 // pred_region
      %29 = dma.done [#allocation3], 256
    $region17: #{ear_measure_encoder_forward.1} parent=1 // pred_fallthru
      _
    %v30 = vld [vmem:[%s0] sm:$0xff]
    %v31 = vld [vmem:[#allocation2] sm:$0xff]
    %v32 = vld [vmem:[#allocation2 + $0x8] sm:$0xff]
    %v33 = vld [vmem:[%s2] sm:$0x1]
    %v35 = vperm.slane %v33, 0
    %vm37 = vcmask 130048
    %v39 = vsel %vm37, %v30, 0
    %41 = vmatpush.msra.mxu0 0.0
    %42 = vmatpush.msra.mxu0 0.0
    %43 = vmatpush.msra.mxu0 0.0
    %44 = vmatpush.msra.mxu0 0.0
    %45 = vmatpush.msra.mxu0 0.0
    %46 = vmatpush.msra.mxu0 0.0
    %47 = vmatpush.msra.mxu0 0.0
    %48 = vmatpush.msra.mxu0 0.0
    %49 = vmatpush.msra.mxu0 0.0
    %50 = vmatpush.msra.mxu0 0.0
    %51 = vmatpush.msra.mxu0 0.0
    %52 = vmatpush.msra.mxu0 0.0
    %53 = vmatpush.msra.mxu0 0.0
    %54 = vmatpush.msra.mxu0 0.0
    %55 = vmatpush.msra.mxu0 %v32
    %56 = vmatpush.msra.mxu0 %v31
    %57 = vmatmul.f32.gmra.mxu0 %v39
    %v58 = vpop.f32.mrf.mxu0
    %v59 = vadd.f32 %v35, %v58
    %60 = vdwg.mxu0
    %61 = vst [vmem:[%s3] sm:$0xff] %v59
    // Predicated region
    $region18: #{ear_measure_encoder_forward.1} parent=1 // pred_check
      _
    $region19: #{ear_measure_encoder_forward.1} parent=1 // pred_check_branch
      %63 = sbr.rel (0) target = $region21
    $region20: #{ear_measure_encoder_forward.1} parent=1 // pred_region
      _
    $region21: #{ear_measure_encoder_forward.1} parent=1 // pred_fallthru
      _
    // Predicated region
    $region22: #{ear_measure_encoder_forward.1} parent=1 // pred_check
      _
    $region23: #{ear_measure_encoder_forward.1} parent=1 // pred_check_branch
      %65 = sbr.rel (0) target = $region25
    $region24: #{ear_measure_encoder_forward.1} parent=1 // pred_region
      _
    $region25: #{ear_measure_encoder_forward.1} parent=1 // pred_fallthru
      _
    %66 = vsyncpa [#allocation3], 1

</llo_original>
